<compile_context>
chip_gen: v7x
topology: tpu7x:2x2x1
jax: 0.10.0
libtpu: 0.0.40
codegen_flags: <defaults>
</compile_context>

<pallas_src>
import jax
import jax.numpy as jnp
from jax.experimental import pallas as pl
from jax.experimental.pallas import tpu as pltpu

NEG_SLOPE = 0.01      # F.leaky_relu default
BN_EPS = 1e-5
FC_PAD = 128          # lane-dense width for the FC layers / output
MAX_TILE = 512        # A_hat tile edge (>=512 reaches ~85% of HBM roofline)
VMEM_LIMIT = 48 * 1024 * 1024   # safe headroom on v5e/v6e and v7x (64 MiB/TC)


def _leaky_relu(x):
    return jnp.where(x > 0, x, NEG_SLOPE * x)


def _round_up(x, m):
    return ((x + m - 1) // m) * m


# ---------------------------------------------------------------------------
# Pass 1: M2 = relu(A_hat @ (X @ W1) + b1) @ W2      (conv1 + projection of conv2)
# grid = (row_panel 'parallel', k 'arbitrary')
# ---------------------------------------------------------------------------
def conv1_kernel(a_ref, x_ref, w1_ref, w2_ref, bias_ref, m2_ref, acc_ref):
    k = pl.program_id(1)

    @pl.when(k == 0)
    def _():
        acc_ref[...] = jnp.zeros_like(acc_ref)

    # (X @ W1) for this K-panel (tiny matmul, hidden under the A_hat DMA),
    # then accumulate the A propagation in f32.
    xw1 = jnp.dot(x_ref[...], w1_ref[...], preferred_element_type=jnp.float32)
    acc_ref[...] += jnp.dot(a_ref[...], xw1.astype(jnp.bfloat16),
                            preferred_element_type=jnp.float32)

    @pl.when(k == pl.num_programs(1) - 1)
    def _():
        h_dim = w1_ref.shape[1]
        bias = bias_ref[...]
        b1 = bias[0:1, :h_dim]
        h1 = jnp.maximum(acc_ref[...] + b1, 0.0)                      # conv1 + ReLU
        m2_ref[...] = jnp.dot(h1.astype(jnp.bfloat16), w2_ref[...],
                              preferred_element_type=jnp.float32
                              ).astype(m2_ref.dtype)                  # H1 @ W2 (bf16)


# ---------------------------------------------------------------------------
# Pass 2: out = fc2(leaky_relu(fc1_folded(leaky_relu(A_hat @ M2 + b2))))
# (BatchNorm folded into fc1; Dropout in eval mode is identity.)
# ---------------------------------------------------------------------------
def conv2_fc_kernel(a_ref, m2_ref, wf1_ref, wf2_ref, bias_ref, out_ref, acc_ref):
    k = pl.program_id(1)

    @pl.when(k == 0)
    def _():
        acc_ref[...] = jnp.zeros_like(acc_ref)

    acc_ref[...] += jnp.dot(a_ref[...], m2_ref[...],
                            preferred_element_type=jnp.float32)

    @pl.when(k == pl.num_programs(1) - 1)
    def _():
        e_dim = m2_ref.shape[1]
        bias = bias_ref[...]
        b2 = bias[1:2, :e_dim]
        bf1 = bias[2:3, :]
        bf2 = bias[3:4, :]
        h = _leaky_relu(acc_ref[...] + b2)                            # conv2 + LeakyReLU
        h = _leaky_relu(jnp.dot(h.astype(jnp.bfloat16), wf1_ref[...],
                                preferred_element_type=jnp.float32) + bf1)
        out_ref[...] = (jnp.dot(h.astype(jnp.bfloat16), wf2_ref[...],
                                preferred_element_type=jnp.float32) + bf2
                        ).astype(out_ref.dtype)


# ---------------------------------------------------------------------------
# Adjacency builders (plain-JAX glue; scatter has no clean Pallas equivalent)
# ---------------------------------------------------------------------------
def build_norm_adj(edge_index, num_nodes):
    """Dense f32 D^-1/2 (A + I) D^-1/2 (used by the pure-JAX reference)."""
    src, dst = edge_index[0], edge_index[1]
    loops = jnp.arange(num_nodes, dtype=edge_index.dtype)
    src = jnp.concatenate([src, loops])
    dst = jnp.concatenate([dst, loops])
    a = jnp.zeros((num_nodes, num_nodes), jnp.float32).at[dst, src].add(1.0)
    deg = a.sum(axis=1)
    dinv = jnp.where(deg > 0, jax.lax.rsqrt(deg), 0.0)
    return dinv[:, None] * a * dinv[None, :]


def build_norm_adj_bf16_padded(edge_index, num_nodes, padded_nodes):
    """Padded bf16 D^-1/2 (A + I) D^-1/2 built directly (no f32 dense + cast)."""
    src, dst = edge_index[0], edge_index[1]
    loops = jnp.arange(num_nodes, dtype=edge_index.dtype)
    src = jnp.concatenate([src, loops])
    dst = jnp.concatenate([dst, loops])
    deg = jnp.zeros((num_nodes,), jnp.float32).at[dst].add(1.0)
    dinv = jnp.where(deg > 0, jax.lax.rsqrt(deg), 0.0)
    vals = (dinv[dst] * dinv[src]).astype(jnp.bfloat16)
    a = jnp.zeros((padded_nodes, padded_nodes), jnp.bfloat16).at[dst, src].add(vals)
    return a


# ---------------------------------------------------------------------------
# Wrapper
# ---------------------------------------------------------------------------
def model_deep_no_features(edge_index, num_nodes, params):
    f32, bf16 = jnp.float32, jnp.bfloat16
    N = num_nodes

    E = params["embedding"].shape[1]
    H = params["w1"].shape[1]
    n_fc1 = params["wf1"].shape[1]   # 10
    n_out = params["wf2"].shape[1]   # 5
    P = FC_PAD
    assert E <= P and H <= P and n_fc1 <= P and n_out <= P

    # ---- tiling: square T x T tiles of A_hat, padded node count ---------------
    T = min(MAX_TILE, _round_up(N, 128))
    Np = _round_up(N, T)
    grid = (Np // T, Np // T)          # (row panels, K panels)
    grid_rows = grid[0]

    # ---- operands (bf16 MXU inputs, built at padded shapes) -------------------
    a_p = build_norm_adj_bf16_padded(edge_index, N, Np)                 # [Np, Np] bf16
    emb_p = jnp.zeros((Np, E), bf16).at[:N, :].set(
        params["embedding"].astype(bf16))                               # [Np, E]
    w1_b = params["w1"].astype(bf16)                                    # [E, H]
    w2_b = params["w2"].astype(bf16)                                    # [H, E]

    # ---- fold eval-mode BatchNorm into fc_block1 -------------------------------
    inv_std = jax.lax.rsqrt(params["bn_rvar"] + BN_EPS)                 # [1, E]
    scale = params["bn_gamma"] * inv_std
    shift = params["bn_beta"] - params["bn_rmean"] * scale
    wf1_fold = scale.reshape(E, 1) * params["wf1"]                      # [E, n_fc1]
    bf1_fold = params["bf1"] + shift @ params["wf1"]                    # [1, n_fc1]

    # ---- lane-dense padding of the FC layers -----------------------------------
    wf1_p = jnp.zeros((E, P), f32).at[:, :n_fc1].set(wf1_fold).astype(bf16)
    wf2_p = jnp.zeros((P, P), f32).at[:n_fc1, :n_out].set(params["wf2"]).astype(bf16)

    # ---- pack all small bias vectors into one [4, P] f32 input -----------------
    bias = jnp.zeros((4, P), f32)
    bias = bias.at[0, :H].set(params["b1"].reshape(H))
    bias = bias.at[1, :E].set(params["b2"].reshape(E))
    bias = bias.at[2, :n_fc1].set(bf1_fold.reshape(n_fc1))
    bias = bias.at[3, :n_out].set(params["bf2"].reshape(n_out))

    cparams = pltpu.CompilerParams(
        dimension_semantics=("parallel", "arbitrary"),
        vmem_limit_bytes=VMEM_LIMIT,
    )

    # ---------------- pass 1: conv1 (+ W2 projection) ---------------------------
    flops1 = 2 * Np * Np * H + 2 * grid_rows * Np * E * H + 2 * Np * H * E
    bytes1 = 2 * Np * Np + grid_rows * Np * E * 2 + Np * E * 2 + 2 * (E * H + H * E) + 4 * P * 4
    cost1 = pl.CostEstimate(flops=flops1, transcendentals=0, bytes_accessed=bytes1)

    m2 = pl.pallas_call(
        conv1_kernel,
        out_shape=jax.ShapeDtypeStruct((Np, E), bf16),
        grid=grid,
        in_specs=[
            pl.BlockSpec((T, T), lambda i, k: (i, k)),     # A_hat tile
            pl.BlockSpec((T, E), lambda i, k: (k, 0)),     # embedding K-panel
            pl.BlockSpec((E, H), lambda i, k: (0, 0)),     # W1 (resident)
            pl.BlockSpec((H, E), lambda i, k: (0, 0)),     # W2 (resident)
            pl.BlockSpec((4, P), lambda i, k: (0, 0)),     # packed biases (resident)
        ],
        out_specs=pl.BlockSpec((T, E), lambda i, k: (i, 0)),
        scratch_shapes=[pltpu.VMEM((T, H), jnp.float32)],
        compiler_params=cparams,
        cost_estimate=cost1,
    )(a_p, emb_p, w1_b, w2_b, bias)

    # ---------------- pass 2: conv2 + BN(folded) + FC1 + FC2 --------------------
    flops2 = 2 * Np * Np * E + 2 * Np * E * P + 2 * Np * P * P
    bytes2 = 2 * Np * Np + grid_rows * Np * E * 2 + Np * P * 2 + 2 * (E * P + P * P) + 4 * P * 4
    cost2 = pl.CostEstimate(flops=flops2, transcendentals=0, bytes_accessed=bytes2)

    out = pl.pallas_call(
        conv2_fc_kernel,
        out_shape=jax.ShapeDtypeStruct((Np, P), bf16),
        grid=grid,
        in_specs=[
            pl.BlockSpec((T, T), lambda i, k: (i, k)),     # A_hat tile
            pl.BlockSpec((T, E), lambda i, k: (k, 0)),     # M2 K-panel
            pl.BlockSpec((E, P), lambda i, k: (0, 0)),     # folded fc1 weight (resident)
            pl.BlockSpec((P, P), lambda i, k: (0, 0)),     # padded fc2 weight (resident)
            pl.BlockSpec((4, P), lambda i, k: (0, 0)),     # packed biases (resident)
        ],
        out_specs=pl.BlockSpec((T, P), lambda i, k: (i, 0)),
        scratch_shapes=[pltpu.VMEM((T, E), jnp.float32)],
        compiler_params=cparams,
        cost_estimate=cost2,
    )(a_p, m2, wf1_p, wf2_p, bias)

    # real logits live in rows [:N], columns [:n_out]
    return out[:N, :n_out].astype(f32)


# ---------------------------------------------------------------------------
# Pure-JAX f32 reference (unfolded BN, unpadded FC)
# ---------------------------------------------------------------------------
def _reference(edge_index, num_nodes, params):
    a = build_norm_adj(edge_index, num_nodes)
    x = params["embedding"]
    h = a @ (x @ params["w1"]) + params["b1"]
    h = jnp.maximum(h, 0.0)
    h = a @ (h @ params["w2"]) + params["b2"]
    h = _leaky_relu(h)
    h = (h - params["bn_rmean"]) / jnp.sqrt(params["bn_rvar"] + BN_EPS) \
        * params["bn_gamma"] + params["bn_beta"]
    h = _leaky_relu(h @ params["wf1"] + params["bf1"])
    return h @ params["wf2"] + params["bf2"]


def init_params(key, num_nodes, embedding_size, hidden_layers):
    ks = jax.random.split(key, 8)
    f32 = jnp.float32
    return {
        # nn.Embedding(num_nodes, embedding_size)
        "embedding": jax.random.normal(ks[0], (num_nodes, embedding_size), f32),
        # GCNConv(embedding_size, hidden_layers): weight [in, out], bias [out]
        "w1": jax.random.normal(ks[1], (embedding_size, hidden_layers), f32)
              / jnp.sqrt(f32(embedding_size)),
        "b1": 0.01 * jax.random.normal(ks[2], (1, hidden_layers), f32),
        # GCNConv(hidden_layers, embedding_size)
        "w2": jax.random.normal(ks[3], (hidden_layers, embedding_size), f32)
              / jnp.sqrt(f32(hidden_layers)),
        "b2": 0.01 * jax.random.normal(ks[4], (1, embedding_size), f32),
        # BatchNorm1d(embedding_size) — eval mode uses running stats
        "bn_gamma": jnp.ones((1, embedding_size), f32),
        "bn_beta": jnp.zeros((1, embedding_size), f32),
        "bn_rmean": jnp.zeros((1, embedding_size), f32),
        "bn_rvar": jnp.ones((1, embedding_size), f32),
        # Linear(embedding_size, 10)
        "wf1": jax.random.normal(ks[5], (embedding_size, 10), f32)
               / jnp.sqrt(f32(embedding_size)),
        "bf1": 0.01 * jax.random.normal(ks[6], (1, 10), f32),
        # Linear(10, 5)
        "wf2": jax.random.normal(ks[7], (10, 5), f32) / jnp.sqrt(f32(10)),
        "bf2": jnp.zeros((1, 5), f32),
    }


if __name__ == "__main__":
    num_nodes = 16
    embedding_size = 32
    hidden_layers = 32
    num_edges = 40

    key = jax.random.PRNGKey(0)
    pkey, ekey = jax.random.split(key)

    params = init_params(pkey, num_nodes, embedding_size, hidden_layers)
    edge_index = jax.random.randint(ekey, (2, num_edges), 0, num_nodes, dtype=jnp.int32)

    out = model_deep_no_features(edge_index, num_nodes, params)
    out = jax.block_until_ready(out)
    assert out.shape == (num_nodes, 5)

    ref = _reference(edge_index, num_nodes, params)
    # Tolerance loosened vs. pure-f32 because MXU operands, the M2 intermediate
    # and the kernel output are bf16 (f32 accumulation); observed error O(1e-3).
    assert jnp.allclose(out, ref, rtol=2e-2, atol=2e-2), "mismatch vs JAX reference"

    print("KERNEL_OK")
</pallas_src>

<mosaic_0001>
module attributes {stable_mosaic.version = 11 : i64} {
  func.func @conv1_kernel(%arg0: i32, %arg1: i32, %arg2: memref<128x128xbf16, #tpu.memory_space<vmem>>, %arg3: memref<128x32xbf16, #tpu.memory_space<vmem>>, %arg4: memref<32x32xbf16, #tpu.memory_space<vmem>>, %arg5: memref<32x32xbf16, #tpu.memory_space<vmem>>, %arg6: memref<4x128xf32, #tpu.memory_space<vmem>>, %arg7: memref<128x32xbf16, #tpu.memory_space<vmem>>, %arg8: memref<128x32xf32, #tpu.memory_space<vmem>>) attributes {dimension_semantics = [#tpu.dimension_semantics<parallel>, #tpu.dimension_semantics<arbitrary>], iteration_bounds = array<i64: 1, 1>, scalar_prefetch = 0 : i64, scratch_operands = 1 : i64, tpu.core_type = #tpu.core_type<tc>, window_params = [{transform_indices = @transform_0, window_bounds = array<i64: 128, 128>}, {transform_indices = @transform_1, window_bounds = array<i64: 128, 32>}, {pipeline_mode = #tpu.pipeline_mode<synchronous>, transform_indices = @transform_2, window_bounds = array<i64: 32, 32>}, {pipeline_mode = #tpu.pipeline_mode<synchronous>, transform_indices = @transform_3, window_bounds = array<i64: 32, 32>}, {pipeline_mode = #tpu.pipeline_mode<synchronous>, transform_indices = @transform_4, window_bounds = array<i64: 4, 128>}, {transform_indices = @transform_5, window_bounds = array<i64: 128, 32>}]} {
    %c0_i32 = arith.constant 0 : i32
    %0 = arith.cmpi eq, %arg1, %c0_i32 : i32
    %1 = arith.extui %0 : i1 to i32
    %c0_i32_0 = arith.constant 0 : i32
    %2 = arith.cmpi ne, %1, %c0_i32_0 : i32
    scf.if %2 {
      %cst_13 = arith.constant 0.000000e+00 : f32
      %15 = vector.broadcast %cst_13 : f32 to vector<128x32xf32>
      %c0_14 = arith.constant 0 : index
      %c0_15 = arith.constant 0 : index
      %16 = vector.load %arg8[%c0_14, %c0_15] : memref<128x32xf32, #tpu.memory_space<vmem>>, vector<128x32xf32>
      tpu.vector_store %arg8[%c0_14, %c0_15], %15 {strides = array<i32>} : memref<128x32xf32, #tpu.memory_space<vmem>>, vector<128x32xf32>,
    } else {
    }
    %c0 = arith.constant 0 : index
    %c0_1 = arith.constant 0 : index
    %3 = vector.load %arg3[%c0, %c0_1] : memref<128x32xbf16, #tpu.memory_space<vmem>>, vector<128x32xbf16>
    %c0_2 = arith.constant 0 : index
    %c0_3 = arith.constant 0 : index
    %4 = vector.load %arg4[%c0_2, %c0_3] : memref<32x32xbf16, #tpu.memory_space<vmem>>, vector<32x32xbf16>
    %cst = arith.constant dense<0.000000e+00> : vector<128x32xf32>
    %5 = tpu.matmul %3, %4, %cst {dimension_numbers = #tpu.dot_dimension_numbers<[1], [0], [0], [1], [0, 0, 1, 1], [], []>} : vector<128x32xbf16>, vector<32x32xbf16>, vector<128x32xf32> -> vector<128x32xf32>
    %c0_4 = arith.constant 0 : index
    %c0_5 = arith.constant 0 : index
    %6 = vector.load %arg8[%c0_4, %c0_5] : memref<128x32xf32, #tpu.memory_space<vmem>>, vector<128x32xf32>
    %c0_6 = arith.constant 0 : index
    %c0_7 = arith.constant 0 : index
    %7 = vector.load %arg2[%c0_6, %c0_7] : memref<128x128xbf16, #tpu.memory_space<vmem>>, vector<128x128xbf16>
    %8 = arith.truncf %5 : vector<128x32xf32> to vector<128x32xbf16>
    %cst_8 = arith.constant dense<0.000000e+00> : vector<128x32xf32>
    %9 = tpu.matmul %7, %8, %cst_8 {dimension_numbers = #tpu.dot_dimension_numbers<[1], [0], [0], [1], [0, 0, 1, 1], [], []>} : vector<128x128xbf16>, vector<128x32xbf16>, vector<128x32xf32> -> vector<128x32xf32>
    %10 = arith.addf %6, %9 : vector<128x32xf32>
    %c0_9 = arith.constant 0 : index
    %c0_10 = arith.constant 0 : index
    %11 = vector.load %arg8[%c0_9, %c0_10] : memref<128x32xf32, #tpu.memory_space<vmem>>, vector<128x32xf32>
    tpu.vector_store %arg8[%c0_9, %c0_10], %10 {strides = array<i32>} : memref<128x32xf32, #tpu.memory_space<vmem>>, vector<128x32xf32>,
    %c0_i32_11 = arith.constant 0 : i32
    %12 = arith.cmpi eq, %arg1, %c0_i32_11 : i32
    %13 = arith.extui %12 : i1 to i32
    %c0_i32_12 = arith.constant 0 : i32
    %14 = arith.cmpi ne, %13, %c0_i32_12 : i32
    scf.if %14 {
      %c0_13 = arith.constant 0 : index
      %c0_14 = arith.constant 0 : index
      %15 = vector.load %arg6[%c0_13, %c0_14] : memref<4x128xf32, #tpu.memory_space<vmem>>, vector<4x128xf32>
      %16 = vector.extract_strided_slice %15 {offsets = [0, 0], sizes = [1, 32], strides = [1, 1]} : vector<4x128xf32> to vector<1x32xf32>
      %c0_15 = arith.constant 0 : index
      %c0_16 = arith.constant 0 : index
      %17 = vector.load %arg8[%c0_15, %c0_16] : memref<128x32xf32, #tpu.memory_space<vmem>>, vector<128x32xf32>
      %18 = vector.broadcast %16 : vector<1x32xf32> to vector<128x32xf32>
      %19 = arith.addf %17, %18 : vector<128x32xf32>
      %cst_17 = arith.constant 0.000000e+00 : f32
      %20 = vector.broadcast %cst_17 : f32 to vector<128x32xf32>
      %21 = arith.maximumf %19, %20 : vector<128x32xf32>
      %22 = arith.truncf %21 : vector<128x32xf32> to vector<128x32xbf16>
      %c0_18 = arith.constant 0 : index
      %c0_19 = arith.constant 0 : index
      %23 = vector.load %arg5[%c0_18, %c0_19] : memref<32x32xbf16, #tpu.memory_space<vmem>>, vector<32x32xbf16>
      %cst_20 = arith.constant dense<0.000000e+00> : vector<128x32xf32>
      %24 = tpu.matmul %22, %23, %cst_20 {dimension_numbers = #tpu.dot_dimension_numbers<[1], [0], [0], [1], [0, 0, 1, 1], [], []>} : vector<128x32xbf16>, vector<32x32xbf16>, vector<128x32xf32> -> vector<128x32xf32>
      %25 = arith.truncf %24 : vector<128x32xf32> to vector<128x32xbf16>
      %c0_21 = arith.constant 0 : index
      %c0_22 = arith.constant 0 : index
      %26 = vector.load %arg7[%c0_21, %c0_22] : memref<128x32xbf16, #tpu.memory_space<vmem>>, vector<128x32xbf16>
      tpu.vector_store %arg7[%c0_21, %c0_22], %25 {strides = array<i32>} : memref<128x32xbf16, #tpu.memory_space<vmem>>, vector<128x32xbf16>,
    } else {
    }
    return
  }
  func.func @transform_0(%arg0: i32, %arg1: i32) -> (i32, i32) {
    %c0_i32 = arith.constant 0 : i32
    return %arg0, %arg1 : i32, i32
  }
  func.func @transform_1(%arg0: i32, %arg1: i32) -> (i32, i32) {
    %c0_i32 = arith.constant 0 : i32
    %c0_i32_0 = arith.constant 0 : i32
    return %arg1, %c0_i32 : i32, i32
  }
  func.func @transform_2(%arg0: i32, %arg1: i32) -> (i32, i32) {
    %c0_i32 = arith.constant 0 : i32
    %c0_i32_0 = arith.constant 0 : i32
    %c0_i32_1 = arith.constant 0 : i32
    return %c0_i32, %c0_i32_0 : i32, i32
  }
  func.func @transform_3(%arg0: i32, %arg1: i32) -> (i32, i32) {
    %c0_i32 = arith.constant 0 : i32
    %c0_i32_0 = arith.constant 0 : i32
    %c0_i32_1 = arith.constant 0 : i32
    return %c0_i32, %c0_i32_0 : i32, i32
  }
  func.func @transform_4(%arg0: i32, %arg1: i32) -> (i32, i32) {
    %c0_i32 = arith.constant 0 : i32
    %c0_i32_0 = arith.constant 0 : i32
    %c0_i32_1 = arith.constant 0 : i32
    return %c0_i32, %c0_i32_0 : i32, i32
  }
  func.func @transform_5(%arg0: i32, %arg1: i32) -> (i32, i32) {
    %c0_i32 = arith.constant 0 : i32
    %c0_i32_0 = arith.constant 0 : i32
    return %arg0, %c0_i32 : i32, i32
  }
}

</mosaic_0001>

<llo_original>
// kernel: tpu_custom_call.1
$region0: #{tpu_custom_call.1}
  #allocation0 [shape = 'u32[]', space=smem, size = 0x4, offset = 0x4, fixed_abs, tag = 'smem constant byte address 0x4 - core index']
  #allocation1 [shape = 'u32[144,128]{1,0:T(1,128)}', space=vmem, size = 0x12000, scoped, tag = 'internal scratch']
  #allocation2 [shape = 'f32[128,32]{1,0:T(8,128)}', space=vmem, size = 0x10000, scoped, tag = 'scratch operand']
  %s0 = inlined_call_operand.vmem [shape: bf16[128,128], index: 0, kind: input, shape index: {}]
  %s1 = inlined_call_operand.vmem [shape: bf16[128,32], index: 1, kind: input, shape index: {}]
  %s2 = inlined_call_operand.vmem [shape: bf16[32,32], index: 2, kind: input, shape index: {}]
  %s3 = inlined_call_operand.hbm [shape: bf16[32,32], index: 3, kind: input, shape index: {}]
  %s4 = inlined_call_operand.vmem [shape: f32[4,128], index: 4, kind: input, shape index: {}]
  %s5 = inlined_call_operand.vmem [shape: bf16[128,32], index: 5, kind: output, shape index: {}]
  %s6 = sld [smem:[#allocation0]]
  $region42: #{tpu_custom_call.1} parent=0
    _
  %s8 = ssub.s32 1, %s6
  %s9 = scalar_select 0, %s8, %s6
  $region1: #{tpu_custom_call.1} parent=0
    #allocation3 [shape = 'u8[8192]{0}', space=vmem, size = 0x2000, scoped, tag = 'input window, operand 3, single buffered']
    #allocation4 [shape = 's32[1]{0}', space=sflag, size = 0x4, scoped, tag = 'scoped memory for tpu_custom_call.1']
    %10 = vsyncpa [#allocation4], 0
    // Predicated region
    $region2: #{tpu_custom_call.1} parent=1 // pred_check
      _
    $region3: #{tpu_custom_call.1} parent=1 // pred_check_branch
      %12 = sbr.rel (0) target = $region5
    $region4: #{tpu_custom_call.1} parent=1 // pred_region
      _
    $region5: #{tpu_custom_call.1} parent=1 // pred_fallthru
      _
    // Predicated region
    $region6: #{tpu_custom_call.1} parent=1 // pred_check
      _
    $region7: #{tpu_custom_call.1} parent=1 // pred_check_branch
      %14 = sbr.rel (0) target = $region9
    $region8: #{tpu_custom_call.1} parent=1 // pred_region
      _
    $region9: #{tpu_custom_call.1} parent=1 // pred_fallthru
      _
    // Predicated region
    $region10: #{tpu_custom_call.1} parent=1 // pred_check
      _
    $region11: #{tpu_custom_call.1} parent=1 // pred_check_branch
      %16 = sbr.rel (0) target = $region13
    $region12: #{tpu_custom_call.1} parent=1 // pred_region
      _
    $region13: #{tpu_custom_call.1} parent=1 // pred_fallthru
      _
    // Predicated region
    $region14: #{tpu_custom_call.1} parent=1 // pred_check
      _
    $region15: #{tpu_custom_call.1} parent=1 // pred_check_branch
      %18 = sbr.rel (0) target = $region17
    $region16: #{tpu_custom_call.1} parent=1 // pred_region
      %s20 = ssub.s32 256, 256
      %21 = vsyncadd [#allocation4], %s20
      %s22 = sshll.u32 [#allocation3], 4
      %s23 = int_to_ptr.vmem [resolvable:$true] %s22
      %28 = dma.hbm_to_vmem [thread:$0]  %s3, 256, %s23, [#allocation4], 64, 64, 4
    $region17: #{tpu_custom_call.1} parent=1 // pred_fallthru
      _
    // Predicated region
    $region18: #{tpu_custom_call.1} parent=1 // pred_check
      _
    $region19: #{tpu_custom_call.1} parent=1 // pred_check_branch
      %30 = sbr.rel (0) target = $region21
    $region20: #{tpu_custom_call.1} parent=1 // pred_region
      _
    $region21: #{tpu_custom_call.1} parent=1 // pred_fallthru
      _
    // Predicated region
    $region22: #{tpu_custom_call.1} parent=1 // pred_check
      _
    $region23: #{tpu_custom_call.1} parent=1 // pred_check_branch
      %32 = sbr.rel (0) target = $region25
    $region24: #{tpu_custom_call.1} parent=1 // pred_region
      %33 = dma.done [#allocation4], 256
    $region25: #{tpu_custom_call.1} parent=1 // pred_fallthru
      _
    %p35 = scmp.eq.s32.totalorder 0, 0
    // Predicated region
    $region26: #{tpu_custom_call.1} parent=1 // pred_check
      %p36 = pneg %p35
    $region27: #{tpu_custom_call.1} parent=1 // pred_check_branch
      %38 = sbr.rel (%p36) target = $region29
    $region28: #{tpu_custom_call.1} parent=1 // pred_region
      %vm39 = vcmask 261120
      %40 = vst.msk [vmem:[#allocation2] sm:$0xff] %vm39, 0.0
      %41 = vst.msk [vmem:[#allocation2 + $0x8] sm:$0xff] %vm39, 0.0
      %42 = vst.msk [vmem:[#allocation2 + $0x10] sm:$0xff] %vm39, 0.0
      %43 = vst.msk [vmem:[#allocation2 + $0x18] sm:$0xff] %vm39, 0.0
      %44 = vst.msk [vmem:[#allocation2 + $0x20] sm:$0xff] %vm39, 0.0
      %45 = vst.msk [vmem:[#allocation2 + $0x28] sm:$0xff] %vm39, 0.0
      %46 = vst.msk [vmem:[#allocation2 + $0x30] sm:$0xff] %vm39, 0.0
      %47 = vst.msk [vmem:[#allocation2 + $0x38] sm:$0xff] %vm39, 0.0
      %48 = vst.msk [vmem:[#allocation2 + $0x40] sm:$0xff] %vm39, 0.0
      %49 = vst.msk [vmem:[#allocation2 + $0x48] sm:$0xff] %vm39, 0.0
      %50 = vst.msk [vmem:[#allocation2 + $0x50] sm:$0xff] %vm39, 0.0
      %51 = vst.msk [vmem:[#allocation2 + $0x58] sm:$0xff] %vm39, 0.0
      %52 = vst.msk [vmem:[#allocation2 + $0x60] sm:$0xff] %vm39, 0.0
      %53 = vst.msk [vmem:[#allocation2 + $0x68] sm:$0xff] %vm39, 0.0
      %54 = vst.msk [vmem:[#allocation2 + $0x70] sm:$0xff] %vm39, 0.0
      %55 = vst.msk [vmem:[#allocation2 + $0x78] sm:$0xff] %vm39, 0.0
    $region29: #{tpu_custom_call.1} parent=1 // pred_fallthru
      _
    %v56 = vld [vmem:[%s1] sm:$0xf]
    %v57 = vld [vmem:[%s1 + $0x4] sm:$0xf]
    %v58 = vld [vmem:[%s1 + $0x8] sm:$0xf]
    %v59 = vld [vmem:[%s1 + $0xc] sm:$0xf]
    %v60 = vld [vmem:[%s1 + $0x10] sm:$0xf]
    %v61 = vld [vmem:[%s1 + $0x14] sm:$0xf]
    %v62 = vld [vmem:[%s1 + $0x18] sm:$0xf]
    %v63 = vld [vmem:[%s1 + $0x1c] sm:$0xf]
    %v64 = vld [vmem:[%s1 + $0x20] sm:$0xf]
    %v65 = vld [vmem:[%s1 + $0x24] sm:$0xf]
    %v66 = vld [vmem:[%s1 + $0x28] sm:$0xf]
    %v67 = vld [vmem:[%s1 + $0x2c] sm:$0xf]
    %v68 = vld [vmem:[%s1 + $0x30] sm:$0xf]
    %v69 = vld [vmem:[%s1 + $0x34] sm:$0xf]
    %v70 = vld [vmem:[%s1 + $0x38] sm:$0xf]
    %v71 = vld [vmem:[%s1 + $0x3c] sm:$0xf]
    %v72 = vld [vmem:[%s2] sm:$0xf]
    %v73 = vld [vmem:[%s2 + $0x4] sm:$0xf]
    %v74 = vld [vmem:[%s2 + $0x8] sm:$0xf]
    %v75 = vld [vmem:[%s2 + $0xc] sm:$0xf]
    %v92 = vunpack.c.l.b16 %v56
    %v93 = vunpack.c.l.b16 %v57
    %v94 = vunpack.c.l.b16 %v58
    %v95 = vunpack.c.l.b16 %v59
    %v96 = vunpack.c.l.b16 %v60
    %v97 = vunpack.c.l.b16 %v61
    %v98 = vunpack.c.l.b16 %v62
    %v99 = vunpack.c.l.b16 %v63
    %v100 = vunpack.c.l.b16 %v64
    %v101 = vunpack.c.l.b16 %v65
    %v102 = vunpack.c.l.b16 %v66
    %v103 = vunpack.c.l.b16 %v67
    %v104 = vunpack.c.l.b16 %v68
    %v105 = vunpack.c.l.b16 %v69
    %v106 = vunpack.c.l.b16 %v70
    %v107 = vunpack.c.l.b16 %v71
    %v108 = vpack.c.b16 %v93, %v92
    %v109 = vpack.c.b16 %v95, %v94
    %v110 = vpack.c.b16 %v97, %v96
    %v111 = vpack.c.b16 %v99, %v98
    %v112 = vpack.c.b16 %v101, %v100
    %v113 = vpack.c.b16 %v103, %v102
    %v114 = vpack.c.b16 %v105, %v104
    %v115 = vpack.c.b16 %v107, %v106
    %v120 = vunpack.c.l.b16 %v72
    %v121 = vunpack.c.l.b16 %v73
    %v122 = vunpack.c.l.b16 %v74
    %v123 = vunpack.c.l.b16 %v75
    %v124 = vpack.c.b16 %v121, %v120
    %v125 = vpack.c.b16 %v123, %v122
    %vm128 = vcmask 261120
    %v130 = vsel %vm128, %v108, 0
    %v133 = vsel %vm128, %v109, 0
    %v136 = vsel %vm128, %v110, 0
    %v139 = vsel %vm128, %v111, 0
    %v142 = vsel %vm128, %v112, 0
    %v145 = vsel %vm128, %v113, 0
    %v148 = vsel %vm128, %v114, 0
    %v151 = vsel %vm128, %v115, 0
    %153 = vmatprep.subr.bf16.mxu0 0
    %154 = vmatpush1.bf16.msra.mxu0 %v124
    %155 = vmatprep.subr.bf16.mxu0 0
    %156 = vmatpush1.bf16.msra.mxu0 %v125
    %157 = vmatprep.subr.bf16.mxu0 0
    %158 = vmatpush1.bf16.msra.mxu0 0
    %159 = vmatprep.subr.bf16.mxu0 0
    %160 = vmatpush1.bf16.msra.mxu0 0
    %161 = vmatprep.subr.bf16.mxu0 0
    %162 = vmatpush1.bf16.msra.mxu0 0
    %163 = vmatprep.subr.bf16.mxu0 0
    %164 = vmatpush1.bf16.msra.mxu0 0
    %165 = vmatprep.subr.bf16.mxu0 0
    %166 = vmatpush1.bf16.msra.mxu0 0
    %167 = vmatprep.subr.bf16.mxu0 0
    %168 = vmatpush1.bf16.msra.mxu0 0
    %169 = vmatprep.subr.bf16.mxu0 0
    %170 = vmatpush1.bf16.msra.mxu0 0
    %171 = vmatprep.subr.bf16.mxu0 0
    %172 = vmatpush1.bf16.msra.mxu0 0
    %173 = vmatprep.subr.bf16.mxu0 0
    %174 = vmatpush1.bf16.msra.mxu0 0
    %175 = vmatprep.subr.bf16.mxu0 0
    %176 = vmatpush1.bf16.msra.mxu0 0
    %177 = vmatprep.subr.bf16.mxu0 0
    %178 = vmatpush1.bf16.msra.mxu0 0
    %179 = vmatprep.subr.bf16.mxu0 0
    %180 = vmatpush1.bf16.msra.mxu0 0
    %181 = vmatprep.subr.bf16.mxu0 0
    %182 = vmatpush1.bf16.msra.mxu0 0
    %183 = vmatprep.subr.bf16.mxu0 0
    %184 = vmatpush1.bf16.msra.mxu0 0
    %185 = vmatprep.mubr.bf16.mxu0 0
    %186 = vmatmul.mubr.bf16.gmra.mrb[0].mxu0 %v130
    %v187 = vpop.f32.mrb[0].mxu0
    %v188 = vadd.f32 0.0, %v187
    %v189 = vpop.f32.mrb[0].mxu0
    %v190 = vpop.f32.mrb[0].mxu0
    %v191 = vadd.f32 0.0, %v190
    %v192 = vpop.f32.mrb[0].mxu0
    %193 = vmatprep.mubr.bf16.mxu0 0
    %194 = vmatmul.mubr.bf16.gmra.mrb[0].mxu0 %v133
    %v195 = vpop.f32.mrb[0].mxu0
    %v196 = vadd.f32 0.0, %v195
    %v197 = vpop.f32.mrb[0].mxu0
    %v198 = vpop.f32.mrb[0].mxu0
    %v199 = vadd.f32 0.0, %v198
    %v200 = vpop.f32.mrb[0].mxu0
    %201 = vmatprep.mubr.bf16.mxu0 0
    %202 = vmatmul.mubr.bf16.gmra.mrb[0].mxu0 %v136
    %v203 = vpop.f32.mrb[0].mxu0
    %v204 = vadd.f32 0.0, %v203
    %v205 = vpop.f32.mrb[0].mxu0
    %v206 = vpop.f32.mrb[0].mxu0
    %v207 = vadd.f32 0.0, %v206
    %v208 = vpop.f32.mrb[0].mxu0
    %209 = vmatprep.mubr.bf16.mxu0 0
    %210 = vmatmul.mubr.bf16.gmra.mrb[0].mxu0 %v139
    %v211 = vpop.f32.mrb[0].mxu0
    %v212 = vadd.f32 0.0, %v211
    %v213 = vpop.f32.mrb[0].mxu0
    %v214 = vpop.f32.mrb[0].mxu0
    %v215 = vadd.f32 0.0, %v214
    %v216 = vpop.f32.mrb[0].mxu0
    %217 = vmatprep.mubr.bf16.mxu0 0
    %218 = vmatmul.mubr.bf16.gmra.mrb[0].mxu0 %v142
    %v219 = vpop.f32.mrb[0].mxu0
    %v220 = vadd.f32 0.0, %v219
    %v221 = vpop.f32.mrb[0].mxu0
    %v222 = vpop.f32.mrb[0].mxu0
    %v223 = vadd.f32 0.0, %v222
    %v224 = vpop.f32.mrb[0].mxu0
    %225 = vmatprep.mubr.bf16.mxu0 0
    %226 = vmatmul.mubr.bf16.gmra.mrb[0].mxu0 %v145
    %v227 = vpop.f32.mrb[0].mxu0
    %v228 = vadd.f32 0.0, %v227
    %v229 = vpop.f32.mrb[0].mxu0
    %v230 = vpop.f32.mrb[0].mxu0
    %v231 = vadd.f32 0.0, %v230
    %v232 = vpop.f32.mrb[0].mxu0
    %233 = vmatprep.mubr.bf16.mxu0 0
    %234 = vmatmul.mubr.bf16.gmra.mrb[0].mxu0 %v148
    %v235 = vpop.f32.mrb[0].mxu0
    %v236 = vadd.f32 0.0, %v235
    %v237 = vpop.f32.mrb[0].mxu0
    %v238 = vpop.f32.mrb[0].mxu0
    %v239 = vadd.f32 0.0, %v238
    %v240 = vpop.f32.mrb[0].mxu0
    %241 = vmatprep.mubr.bf16.mxu0 0
    %242 = vmatmul.mubr.bf16.gmra.mrb[0].mxu0 %v151
    %v243 = vpop.f32.mrb[0].mxu0
    %v244 = vadd.f32 0.0, %v243
    %v245 = vpop.f32.mrb[0].mxu0
    %v246 = vpop.f32.mrb[0].mxu0
    %v247 = vadd.f32 0.0, %v246
    %v248 = vpop.f32.mrb[0].mxu0
    %249 = vdwg.mxu0
    %v250 = vld [vmem:[#allocation2] sm:$0xff]
    %v251 = vld [vmem:[#allocation2 + $0x8] sm:$0xff]
    %v252 = vld [vmem:[#allocation2 + $0x10] sm:$0xff]
    %v253 = vld [vmem:[#allocation2 + $0x18] sm:$0xff]
    %v254 = vld [vmem:[#allocation2 + $0x20] sm:$0xff]
    %v255 = vld [vmem:[#allocation2 + $0x28] sm:$0xff]
    %v256 = vld [vmem:[#allocation2 + $0x30] sm:$0xff]
    %v257 = vld [vmem:[#allocation2 + $0x38] sm:$0xff]
    %v258 = vld [vmem:[#allocation2 + $0x40] sm:$0xff]
    %v259 = vld [vmem:[#allocation2 + $0x48] sm:$0xff]
    %v260 = vld [vmem:[#allocation2 + $0x50] sm:$0xff]
    %v261 = vld [vmem:[#allocation2 + $0x58] sm:$0xff]
    %v262 = vld [vmem:[#allocation2 + $0x60] sm:$0xff]
    %v263 = vld [vmem:[#allocation2 + $0x68] sm:$0xff]
    %v264 = vld [vmem:[#allocation2 + $0x70] sm:$0xff]
    %v265 = vld [vmem:[#allocation2 + $0x78] sm:$0xff]
    %v266 = vld [vmem:[%s0] sm:$0xf]
    %v267 = vld [vmem:[%s0 + $0x4] sm:$0xf]
    %v268 = vld [vmem:[%s0 + $0x8] sm:$0xf]
    %v269 = vld [vmem:[%s0 + $0xc] sm:$0xf]
    %v270 = vld [vmem:[%s0 + $0x10] sm:$0xf]
    %v271 = vld [vmem:[%s0 + $0x14] sm:$0xf]
    %v272 = vld [vmem:[%s0 + $0x18] sm:$0xf]
    %v273 = vld [vmem:[%s0 + $0x1c] sm:$0xf]
    %v274 = vld [vmem:[%s0 + $0x20] sm:$0xf]
    %v275 = vld [vmem:[%s0 + $0x24] sm:$0xf]
    %v276 = vld [vmem:[%s0 + $0x28] sm:$0xf]
    %v277 = vld [vmem:[%s0 + $0x2c] sm:$0xf]
    %v278 = vld [vmem:[%s0 + $0x30] sm:$0xf]
    %v279 = vld [vmem:[%s0 + $0x34] sm:$0xf]
    %v280 = vld [vmem:[%s0 + $0x38] sm:$0xf]
    %v281 = vld [vmem:[%s0 + $0x3c] sm:$0xf]
    %v282 = vpack.c.bf16 %v191, %v188
    %v283 = vpack.c.bf16 %v199, %v196
    %v284 = vpack.c.bf16 %v207, %v204
    %v285 = vpack.c.bf16 %v215, %v212
    %v286 = vpack.c.bf16 %v223, %v220
    %v287 = vpack.c.bf16 %v231, %v228
    %v288 = vpack.c.bf16 %v239, %v236
    %v289 = vpack.c.bf16 %v247, %v244
    %v306 = vunpack.c.l.b16 %v266
    %v307 = vunpack.c.l.b16 %v267
    %v308 = vunpack.c.l.b16 %v268
    %v309 = vunpack.c.l.b16 %v269
    %v310 = vunpack.c.l.b16 %v270
    %v311 = vunpack.c.l.b16 %v271
    %v312 = vunpack.c.l.b16 %v272
    %v313 = vunpack.c.l.b16 %v273
    %v314 = vunpack.c.l.b16 %v274
    %v315 = vunpack.c.l.b16 %v275
    %v316 = vunpack.c.l.b16 %v276
    %v317 = vunpack.c.l.b16 %v277
    %v318 = vunpack.c.l.b16 %v278
    %v319 = vunpack.c.l.b16 %v279
    %v320 = vunpack.c.l.b16 %v280
    %v321 = vunpack.c.l.b16 %v281
    %v322 = vpack.c.b16 %v307, %v306
    %v323 = vpack.c.b16 %v309, %v308
    %v324 = vpack.c.b16 %v311, %v310
    %v325 = vpack.c.b16 %v313, %v312
    %v326 = vpack.c.b16 %v315, %v314
    %v327 = vpack.c.b16 %v317, %v316
    %v328 = vpack.c.b16 %v319, %v318
    %v329 = vpack.c.b16 %v321, %v320
    %338 = vmatprep.subr.bf16.mxu0 0
    %339 = vmatpush1.bf16.msra.mxu0 %v282
    %340 = vmatprep.subr.bf16.mxu0 0
    %341 = vmatpush1.bf16.msra.mxu0 %v283
    %342 = vmatprep.subr.bf16.mxu0 0
    %343 = vmatpush1.bf16.msra.mxu0 %v284
    %344 = vmatprep.subr.bf16.mxu0 0
    %345 = vmatpush1.bf16.msra.mxu0 %v285
    %346 = vmatprep.subr.bf16.mxu0 0
    %347 = vmatpush1.bf16.msra.mxu0 %v286
    %348 = vmatprep.subr.bf16.mxu0 0
    %349 = vmatpush1.bf16.msra.mxu0 %v287
    %350 = vmatprep.subr.bf16.mxu0 0
    %351 = vmatpush1.bf16.msra.mxu0 %v288
    %352 = vmatprep.subr.bf16.mxu0 0
    %353 = vmatpush1.bf16.msra.mxu0 %v289
    %354 = vmatprep.subr.bf16.mxu0 0
    %355 = vmatpush1.bf16.msra.mxu0 0
    %356 = vmatprep.subr.bf16.mxu0 0
    %357 = vmatpush1.bf16.msra.mxu0 0
    %358 = vmatprep.subr.bf16.mxu0 0
    %359 = vmatpush1.bf16.msra.mxu0 0
    %360 = vmatprep.subr.bf16.mxu0 0
    %361 = vmatpush1.bf16.msra.mxu0 0
    %362 = vmatprep.subr.bf16.mxu0 0
    %363 = vmatpush1.bf16.msra.mxu0 0
    %364 = vmatprep.subr.bf16.mxu0 0
    %365 = vmatpush1.bf16.msra.mxu0 0
    %366 = vmatprep.subr.bf16.mxu0 0
    %367 = vmatpush1.bf16.msra.mxu0 0
    %368 = vmatprep.subr.bf16.mxu0 0
    %369 = vmatpush1.bf16.msra.mxu0 0
    %370 = vmatprep.mubr.bf16.mxu0 0
    %371 = vmatmul.mubr.bf16.gmra.mrb[0].mxu0 %v322
    %v372 = vpop.f32.mrb[0].mxu0
    %v373 = vadd.f32 0.0, %v372
    %v374 = vpop.f32.mrb[0].mxu0
    %v375 = vpop.f32.mrb[0].mxu0
    %v376 = vadd.f32 0.0, %v375
    %v377 = vpop.f32.mrb[0].mxu0
    %378 = vmatprep.mubr.bf16.mxu0 0
    %379 = vmatmul.mubr.bf16.gmra.mrb[0].mxu0 %v323
    %v380 = vpop.f32.mrb[0].mxu0
    %v381 = vadd.f32 0.0, %v380
    %v382 = vpop.f32.mrb[0].mxu0
    %v383 = vpop.f32.mrb[0].mxu0
    %v384 = vadd.f32 0.0, %v383
    %v385 = vpop.f32.mrb[0].mxu0
    %386 = vmatprep.mubr.bf16.mxu0 0
    %387 = vmatmul.mubr.bf16.gmra.mrb[0].mxu0 %v324
    %v388 = vpop.f32.mrb[0].mxu0
    %v389 = vadd.f32 0.0, %v388
    %v390 = vpop.f32.mrb[0].mxu0
    %v391 = vpop.f32.mrb[0].mxu0
    %v392 = vadd.f32 0.0, %v391
    %v393 = vpop.f32.mrb[0].mxu0
    %394 = vmatprep.mubr.bf16.mxu0 0
    %395 = vmatmul.mubr.bf16.gmra.mrb[0].mxu0 %v325
    %v396 = vpop.f32.mrb[0].mxu0
    %v397 = vadd.f32 0.0, %v396
    %v398 = vpop.f32.mrb[0].mxu0
    %v399 = vpop.f32.mrb[0].mxu0
    %v400 = vadd.f32 0.0, %v399
    %v401 = vpop.f32.mrb[0].mxu0
    %402 = vmatprep.mubr.bf16.mxu0 0
    %403 = vmatmul.mubr.bf16.gmra.mrb[0].mxu0 %v326
    %v404 = vpop.f32.mrb[0].mxu0
    %v405 = vadd.f32 0.0, %v404
    %v406 = vpop.f32.mrb[0].mxu0
    %v407 = vpop.f32.mrb[0].mxu0
    %v408 = vadd.f32 0.0, %v407
    %v409 = vpop.f32.mrb[0].mxu0
    %410 = vmatprep.mubr.bf16.mxu0 0
    %411 = vmatmul.mubr.bf16.gmra.mrb[0].mxu0 %v327
    %v412 = vpop.f32.mrb[0].mxu0
    %v413 = vadd.f32 0.0, %v412
    %v414 = vpop.f32.mrb[0].mxu0
    %v415 = vpop.f32.mrb[0].mxu0
    %v416 = vadd.f32 0.0, %v415
    %v417 = vpop.f32.mrb[0].mxu0
    %418 = vmatprep.mubr.bf16.mxu0 0
    %419 = vmatmul.mubr.bf16.gmra.mrb[0].mxu0 %v328
    %v420 = vpop.f32.mrb[0].mxu0
    %v421 = vadd.f32 0.0, %v420
    %v422 = vpop.f32.mrb[0].mxu0
    %v423 = vpop.f32.mrb[0].mxu0
    %v424 = vadd.f32 0.0, %v423
    %v425 = vpop.f32.mrb[0].mxu0
    %426 = vmatprep.mubr.bf16.mxu0 0
    %427 = vmatmul.mubr.bf16.gmra.mrb[0].mxu0 %v329
    %v428 = vpop.f32.mrb[0].mxu0
    %v429 = vadd.f32 0.0, %v428
    %v430 = vpop.f32.mrb[0].mxu0
    %v431 = vpop.f32.mrb[0].mxu0
    %v432 = vadd.f32 0.0, %v431
    %v433 = vpop.f32.mrb[0].mxu0
    %434 = vdwg.mxu0
    %v435 = vadd.f32 %v250, %v373
    %v436 = vadd.f32 %v251, %v376
    %v437 = vadd.f32 %v252, %v381
    %v438 = vadd.f32 %v253, %v384
    %v439 = vadd.f32 %v254, %v389
    %v440 = vadd.f32 %v255, %v392
    %v441 = vadd.f32 %v256, %v397
    %v442 = vadd.f32 %v257, %v400
    %v443 = vadd.f32 %v258, %v405
    %v444 = vadd.f32 %v259, %v408
    %v445 = vadd.f32 %v260, %v413
    %v446 = vadd.f32 %v261, %v416
    %v447 = vadd.f32 %v262, %v421
    %v448 = vadd.f32 %v263, %v424
    %v449 = vadd.f32 %v264, %v429
    %v450 = vadd.f32 %v265, %v432
    %451 = vst.msk [vmem:[#allocation2] sm:$0xff] %vm128, %v435
    %452 = vst.msk [vmem:[#allocation2 + $0x8] sm:$0xff] %vm128, %v436
    %453 = vst.msk [vmem:[#allocation2 + $0x10] sm:$0xff] %vm128, %v437
    %454 = vst.msk [vmem:[#allocation2 + $0x18] sm:$0xff] %vm128, %v438
    %455 = vst.msk [vmem:[#allocation2 + $0x20] sm:$0xff] %vm128, %v439
    %456 = vst.msk [vmem:[#allocation2 + $0x28] sm:$0xff] %vm128, %v440
    %457 = vst.msk [vmem:[#allocation2 + $0x30] sm:$0xff] %vm128, %v441
    %458 = vst.msk [vmem:[#allocation2 + $0x38] sm:$0xff] %vm128, %v442
    %459 = vst.msk [vmem:[#allocation2 + $0x40] sm:$0xff] %vm128, %v443
    %460 = vst.msk [vmem:[#allocation2 + $0x48] sm:$0xff] %vm128, %v444
    %461 = vst.msk [vmem:[#allocation2 + $0x50] sm:$0xff] %vm128, %v445
    %462 = vst.msk [vmem:[#allocation2 + $0x58] sm:$0xff] %vm128, %v446
    %463 = vst.msk [vmem:[#allocation2 + $0x60] sm:$0xff] %vm128, %v447
    %464 = vst.msk [vmem:[#allocation2 + $0x68] sm:$0xff] %vm128, %v448
    %465 = vst.msk [vmem:[#allocation2 + $0x70] sm:$0xff] %vm128, %v449
    %466 = vst.msk [vmem:[#allocation2 + $0x78] sm:$0xff] %vm128, %v450
    // Predicated region
    $region30: #{tpu_custom_call.1} parent=1 // pred_check
      %p467 = pneg %p35
    $region31: #{tpu_custom_call.1} parent=1 // pred_check_branch
      %469 = sbr.rel (%p467) target = $region33
    $region32: #{tpu_custom_call.1} parent=1 // pred_region
      %v470 = vld [vmem:[%s4] sm:$0xf]
      %v471 = vld [vmem:[#allocation2] sm:$0xff]
      %v472 = vld [vmem:[#allocation2 + $0x8] sm:$0xff]
      %v473 = vld [vmem:[#allocation2 + $0x10] sm:$0xff]
      %v474 = vld [vmem:[#allocation2 + $0x18] sm:$0xff]
      %v475 = vld [vmem:[#allocation2 + $0x20] sm:$0xff]
      %v476 = vld [vmem:[#allocation2 + $0x28] sm:$0xff]
      %v477 = vld [vmem:[#allocation2 + $0x30] sm:$0xff]
      %v478 = vld [vmem:[#allocation2 + $0x38] sm:$0xff]
      %v479 = vld [vmem:[#allocation2 + $0x40] sm:$0xff]
      %v480 = vld [vmem:[#allocation2 + $0x48] sm:$0xff]
      %v481 = vld [vmem:[#allocation2 + $0x50] sm:$0xff]
      %v482 = vld [vmem:[#allocation2 + $0x58] sm:$0xff]
      %v483 = vld [vmem:[#allocation2 + $0x60] sm:$0xff]
      %v484 = vld [vmem:[#allocation2 + $0x68] sm:$0xff]
      %v485 = vld [vmem:[#allocation2 + $0x70] sm:$0xff]
      %v486 = vld [vmem:[#allocation2 + $0x78] sm:$0xff]
      %v487 = vlaneseq
      %v488 = vshrl.u32 %v487, 7
      %v489 = vsub.s32 0, %v488
      %v490 = vrot.slane %v470, %v489
      %v491 = vadd.f32 %v471, %v490
      %v492 = vadd.f32 %v472, %v490
      %v493 = vadd.f32 %v473, %v490
      %v494 = vadd.f32 %v474, %v490
      %v495 = vadd.f32 %v475, %v490
      %v496 = vadd.f32 %v476, %v490
      %v497 = vadd.f32 %v477, %v490
      %v498 = vadd.f32 %v478, %v490
      %v499 = vadd.f32 %v479, %v490
      %v500 = vadd.f32 %v480, %v490
      %v501 = vadd.f32 %v481, %v490
      %v502 = vadd.f32 %v482, %v490
      %v503 = vadd.f32 %v483, %v490
      %v504 = vadd.f32 %v484, %v490
      %v505 = vadd.f32 %v485, %v490
      %v506 = vadd.f32 %v486, %v490
      %v507 = vmax.f32 %v491, 0.0
      %v508 = vmax.f32 %v492, 0.0
      %v509 = vmax.f32 %v493, 0.0
      %v510 = vmax.f32 %v494, 0.0
      %v511 = vmax.f32 %v495, 0.0
      %v512 = vmax.f32 %v496, 0.0
      %v513 = vmax.f32 %v497, 0.0
      %v514 = vmax.f32 %v498, 0.0
      %v515 = vmax.f32 %v499, 0.0
      %v516 = vmax.f32 %v500, 0.0
      %v517 = vmax.f32 %v501, 0.0
      %v518 = vmax.f32 %v502, 0.0
      %v519 = vmax.f32 %v503, 0.0
      %v520 = vmax.f32 %v504, 0.0
      %v521 = vmax.f32 %v505, 0.0
      %v522 = vmax.f32 %v506, 0.0
      %v523 = vpack.c.bf16 %v508, %v507
      %v524 = vpack.c.bf16 %v510, %v509
      %v525 = vpack.c.bf16 %v512, %v511
      %v526 = vpack.c.bf16 %v514, %v513
      %v527 = vpack.c.bf16 %v516, %v515
      %v528 = vpack.c.bf16 %v518, %v517
      %v529 = vpack.c.bf16 %v520, %v519
      %v530 = vpack.c.bf16 %v522, %v521
      %v531 = vld [vmem:[#allocation3] sm:$0xf]
      %v532 = vld [vmem:[#allocation3 + $0x4] sm:$0xf]
      %v533 = vld [vmem:[#allocation3 + $0x8] sm:$0xf]
      %v534 = vld [vmem:[#allocation3 + $0xc] sm:$0xf]
      %v539 = vunpack.c.l.b16 %v531
      %v540 = vunpack.c.l.b16 %v532
      %v541 = vunpack.c.l.b16 %v533
      %v542 = vunpack.c.l.b16 %v534
      %v543 = vpack.c.b16 %v540, %v539
      %v544 = vpack.c.b16 %v542, %v541
      %v548 = vsel %vm128, %v523, 0
      %v551 = vsel %vm128, %v524, 0
      %v554 = vsel %vm128, %v525, 0
      %v557 = vsel %vm128, %v526, 0
      %v560 = vsel %vm128, %v527, 0
      %v563 = vsel %vm128, %v528, 0
      %v566 = vsel %vm128, %v529, 0
      %v569 = vsel %vm128, %v530, 0
      %571 = vmatprep.subr.bf16.mxu0 0
      %572 = vmatpush1.bf16.msra.mxu0 %v543
      %573 = vmatprep.subr.bf16.mxu0 0
      %574 = vmatpush1.bf16.msra.mxu0 %v544
      %575 = vmatprep.subr.bf16.mxu0 0
      %576 = vmatpush1.bf16.msra.mxu0 0
      %577 = vmatprep.subr.bf16.mxu0 0
      %578 = vmatpush1.bf16.msra.mxu0 0
      %579 = vmatprep.subr.bf16.mxu0 0
      %580 = vmatpush1.bf16.msra.mxu0 0
      %581 = vmatprep.subr.bf16.mxu0 0
      %582 = vmatpush1.bf16.msra.mxu0 0
      %583 = vmatprep.subr.bf16.mxu0 0
      %584 = vmatpush1.bf16.msra.mxu0 0
      %585 = vmatprep.subr.bf16.mxu0 0
      %586 = vmatpush1.bf16.msra.mxu0 0
      %587 = vmatprep.subr.bf16.mxu0 0
      %588 = vmatpush1.bf16.msra.mxu0 0
      %589 = vmatprep.subr.bf16.mxu0 0
      %590 = vmatpush1.bf16.msra.mxu0 0
      %591 = vmatprep.subr.bf16.mxu0 0
      %592 = vmatpush1.bf16.msra.mxu0 0
      %593 = vmatprep.subr.bf16.mxu0 0
      %594 = vmatpush1.bf16.msra.mxu0 0
      %595 = vmatprep.subr.bf16.mxu0 0
      %596 = vmatpush1.bf16.msra.mxu0 0
      %597 = vmatprep.subr.bf16.mxu0 0
      %598 = vmatpush1.bf16.msra.mxu0 0
      %599 = vmatprep.subr.bf16.mxu0 0
      %600 = vmatpush1.bf16.msra.mxu0 0
      %601 = vmatprep.subr.bf16.mxu0 0
      %602 = vmatpush1.bf16.msra.mxu0 0
      %603 = vmatprep.mubr.bf16.mxu0 0
      %604 = vmatmul.mubr.bf16.gmra.mrb[0].mxu0 %v548
      %v605 = vpop.f32.mrb[0].mxu0
      %v606 = vadd.f32 0.0, %v605
      %v607 = vpop.f32.mrb[0].mxu0
      %v608 = vpop.f32.mrb[0].mxu0
      %v609 = vadd.f32 0.0, %v608
      %v610 = vpop.f32.mrb[0].mxu0
      %611 = vmatprep.mubr.bf16.mxu0 0
      %612 = vmatmul.mubr.bf16.gmra.mrb[0].mxu0 %v551
      %v613 = vpop.f32.mrb[0].mxu0
      %v614 = vadd.f32 0.0, %v613
      %v615 = vpop.f32.mrb[0].mxu0
      %v616 = vpop.f32.mrb[0].mxu0
      %v617 = vadd.f32 0.0, %v616
      %v618 = vpop.f32.mrb[0].mxu0
      %619 = vmatprep.mubr.bf16.mxu0 0
      %620 = vmatmul.mubr.bf16.gmra.mrb[0].mxu0 %v554
      %v621 = vpop.f32.mrb[0].mxu0
      %v622 = vadd.f32 0.0, %v621
      %v623 = vpop.f32.mrb[0].mxu0
      %v624 = vpop.f32.mrb[0].mxu0
      %v625 = vadd.f32 0.0, %v624
      %v626 = vpop.f32.mrb[0].mxu0
      %627 = vmatprep.mubr.bf16.mxu0 0
      %628 = vmatmul.mubr.bf16.gmra.mrb[0].mxu0 %v557
      %v629 = vpop.f32.mrb[0].mxu0
      %v630 = vadd.f32 0.0, %v629
      %v631 = vpop.f32.mrb[0].mxu0
      %v632 = vpop.f32.mrb[0].mxu0
      %v633 = vadd.f32 0.0, %v632
      %v634 = vpop.f32.mrb[0].mxu0
      %635 = vmatprep.mubr.bf16.mxu0 0
      %636 = vmatmul.mubr.bf16.gmra.mrb[0].mxu0 %v560
      %v637 = vpop.f32.mrb[0].mxu0
      %v638 = vadd.f32 0.0, %v637
      %v639 = vpop.f32.mrb[0].mxu0
      %v640 = vpop.f32.mrb[0].mxu0
      %v641 = vadd.f32 0.0, %v640
      %v642 = vpop.f32.mrb[0].mxu0
      %643 = vmatprep.mubr.bf16.mxu0 0
      %644 = vmatmul.mubr.bf16.gmra.mrb[0].mxu0 %v563
      %v645 = vpop.f32.mrb[0].mxu0
      %v646 = vadd.f32 0.0, %v645
      %v647 = vpop.f32.mrb[0].mxu0
      %v648 = vpop.f32.mrb[0].mxu0
      %v649 = vadd.f32 0.0, %v648
      %v650 = vpop.f32.mrb[0].mxu0
      %651 = vmatprep.mubr.bf16.mxu0 0
      %652 = vmatmul.mubr.bf16.gmra.mrb[0].mxu0 %v566
      %v653 = vpop.f32.mrb[0].mxu0
      %v654 = vadd.f32 0.0, %v653
      %v655 = vpop.f32.mrb[0].mxu0
      %v656 = vpop.f32.mrb[0].mxu0
      %v657 = vadd.f32 0.0, %v656
      %v658 = vpop.f32.mrb[0].mxu0
      %659 = vmatprep.mubr.bf16.mxu0 0
      %660 = vmatmul.mubr.bf16.gmra.mrb[0].mxu0 %v569
      %v661 = vpop.f32.mrb[0].mxu0
      %v662 = vadd.f32 0.0, %v661
      %v663 = vpop.f32.mrb[0].mxu0
      %v664 = vpop.f32.mrb[0].mxu0
      %v665 = vadd.f32 0.0, %v664
      %v666 = vpop.f32.mrb[0].mxu0
      %667 = vdwg.mxu0
      %v668 = vpack.c.bf16 %v609, %v606
      %v669 = vpack.c.bf16 %v617, %v614
      %v670 = vpack.c.bf16 %v625, %v622
      %v671 = vpack.c.bf16 %v633, %v630
      %v672 = vpack.c.bf16 %v641, %v638
      %v673 = vpack.c.bf16 %v649, %v646
      %v674 = vpack.c.bf16 %v657, %v654
      %v675 = vpack.c.bf16 %v665, %v662
      %v684 = vunpack.c.l.b16 %v668
      %v685 = vunpack.c.h.b16 %v668
      %v686 = vunpack.c.l.b16 %v669
      %v687 = vunpack.c.h.b16 %v669
      %v688 = vunpack.c.l.b16 %v670
      %v689 = vunpack.c.h.b16 %v670
      %v690 = vunpack.c.l.b16 %v671
      %v691 = vunpack.c.h.b16 %v671
      %v692 = vunpack.c.l.b16 %v672
      %v693 = vunpack.c.h.b16 %v672
      %v694 = vunpack.c.l.b16 %v673
      %v695 = vunpack.c.h.b16 %v673
      %v696 = vunpack.c.l.b16 %v674
      %v697 = vunpack.c.h.b16 %v674
      %v698 = vunpack.c.l.b16 %v675
      %v699 = vunpack.c.h.b16 %v675
      %v700 = vpack.c.b16 %v684, %v684
      %v701 = vpack.c.b16 %v685, %v685
      %v702 = vpack.c.b16 %v686, %v686
      %v703 = vpack.c.b16 %v687, %v687
      %v704 = vpack.c.b16 %v688, %v688
      %v705 = vpack.c.b16 %v689, %v689
      %v706 = vpack.c.b16 %v690, %v690
      %v707 = vpack.c.b16 %v691, %v691
      %v708 = vpack.c.b16 %v692, %v692
      %v709 = vpack.c.b16 %v693, %v693
      %v710 = vpack.c.b16 %v694, %v694
      %v711 = vpack.c.b16 %v695, %v695
      %v712 = vpack.c.b16 %v696, %v696
      %v713 = vpack.c.b16 %v697, %v697
      %v714 = vpack.c.b16 %v698, %v698
      %v715 = vpack.c.b16 %v699, %v699
      %vm732 = vcmask 257024
      %733 = vst.msk [vmem:[%s5] sm:$0xf] %vm732, %v700
      %734 = vst.msk [vmem:[%s5 + $0x4] sm:$0xf] %vm732, %v701
      %735 = vst.msk [vmem:[%s5 + $0x8] sm:$0xf] %vm732, %v702
      %736 = vst.msk [vmem:[%s5 + $0xc] sm:$0xf] %vm732, %v703
      %737 = vst.msk [vmem:[%s5 + $0x10] sm:$0xf] %vm732, %v704
      %738 = vst.msk [vmem:[%s5 + $0x14] sm:$0xf] %vm732, %v705
      %739 = vst.msk [vmem:[%s5 + $0x18] sm:$0xf] %vm732, %v706
      %740 = vst.msk [vmem:[%s5 + $0x1c] sm:$0xf] %vm732, %v707
      %741 = vst.msk [vmem:[%s5 + $0x20] sm:$0xf] %vm732, %v708
      %742 = vst.msk [vmem:[%s5 + $0x24] sm:$0xf] %vm732, %v709
      %743 = vst.msk [vmem:[%s5 + $0x28] sm:$0xf] %vm732, %v710
      %744 = vst.msk [vmem:[%s5 + $0x2c] sm:$0xf] %vm732, %v711
      %745 = vst.msk [vmem:[%s5 + $0x30] sm:$0xf] %vm732, %v712
      %746 = vst.msk [vmem:[%s5 + $0x34] sm:$0xf] %vm732, %v713
      %747 = vst.msk [vmem:[%s5 + $0x38] sm:$0xf] %vm732, %v714
      %748 = vst.msk [vmem:[%s5 + $0x3c] sm:$0xf] %vm732, %v715
    $region33: #{tpu_custom_call.1} parent=1 // pred_fallthru
      _
    // Predicated region
    $region34: #{tpu_custom_call.1} parent=1 // pred_check
      _
    $region35: #{tpu_custom_call.1} parent=1 // pred_check_branch
      %750 = sbr.rel (0) target = $region37
    $region36: #{tpu_custom_call.1} parent=1 // pred_region
      _
    $region37: #{tpu_custom_call.1} parent=1 // pred_fallthru
      _
    // Predicated region
    $region38: #{tpu_custom_call.1} parent=1 // pred_check
      _
    $region39: #{tpu_custom_call.1} parent=1 // pred_check_branch
      %752 = sbr.rel (0) target = $region41
    $region40: #{tpu_custom_call.1} parent=1 // pred_region
      _
    $region41: #{tpu_custom_call.1} parent=1 // pred_fallthru
      _
    %753 = vsyncpa [#allocation4], 1

</llo_original>
